<compile_context>
chip_gen: v7x
topology: tpu7x:2x2x1
jax: 0.10.0
libtpu: 0.0.40
codegen_flags: <defaults>
</compile_context>

<pallas_src>
import functools

import jax
import jax.numpy as jnp
from jax import lax
from jax.experimental import pallas as pl
from jax.experimental.pallas import tpu as pltpu

TEMPERATURE = 0.07
BASE_TEMPERATURE = 0.07

_NEG_BIG = -1e30          # finite "minus infinity" for masked (padded) negatives
_SMALL_NEG_BYTES = 1 << 20  # below this the pure-JAX path wins (overhead-bound)


def _supcon_kernel(anchor_ref, pos_ref, neg_ref, out_ref,
                   m_sc, s_sc, p_sc, *, n_total, need_mask):
    # anchor_ref: (TB, C)   pos_ref: (TB, C)   neg_ref: (NC, TB, C)
    # out_ref:    (1, TB)   per-row loss, written on the last N chunk
    # m_sc/s_sc/p_sc: (1, TB) f32 scratch (running max, running sum-exp,
    #                 positive-column similarity), resident across N chunks.
    j = pl.program_id(1)
    n_chunk = neg_ref.shape[0]
    inv_t = jnp.float32(1.0 / TEMPERATURE)

    anchor = anchor_ref[...]              # stays in the input dtype

    @pl.when(j == 0)
    def _():
        # Initialize the online softmax with the positive column.
        sim_pos = (jnp.sum((anchor * pos_ref[...]).astype(jnp.float32), axis=-1)
                   * inv_t)[None, :]                              # (1, TB)
        p_sc[...] = sim_pos
        m_sc[...] = sim_pos
        s_sc[...] = jnp.ones_like(sim_pos)

    n_base = j * n_chunk

    def body(n, carry):
        m, s = carry
        # One (TB, C) negative slice at a time: no (NC, TB, C) f32 temporaries.
        # (Lane reduce stays on the XLU; compute is far below the HBM stream.)
        sim_n = (jnp.sum((neg_ref[n] * anchor).astype(jnp.float32), axis=-1)
                 * inv_t)[None, :]                                # (1, TB)
        if need_mask:
            valid = (n_base + n) < n_total
            sim_n = jnp.where(valid, sim_n, jnp.full_like(sim_n, _NEG_BIG))
        m_new = jnp.maximum(m, sim_n)
        s = s * jnp.exp(m - m_new) + jnp.exp(sim_n - m_new)
        return m_new, s

    carry0 = (m_sc[...], s_sc[...])
    if n_chunk <= 8:
        m, s = lax.fori_loop(0, n_chunk, body, carry0, unroll=True)
    else:
        m, s = lax.fori_loop(0, n_chunk, body, carry0)
    m_sc[...] = m
    s_sc[...] = s

    @pl.when(j == pl.num_programs(1) - 1)
    def _():
        scale = jnp.float32(TEMPERATURE / BASE_TEMPERATURE)
        log_prob_pos = p_sc[...] - m_sc[...] - jnp.log(s_sc[...])
        out_ref[...] = (-scale * log_prob_pos).astype(out_ref.dtype)


def _round_up(x, m):
    return (x + m - 1) // m * m


def _vmem_budget():
    """Generation-aware VMEM limit and per-grid-step byte budget."""
    cap = 64 * 1024 * 1024
    try:
        info = pltpu.get_tpu_info()
        cap = int(getattr(info, "vmem_capacity_bytes", cap) or cap)
    except Exception:
        pass
    # v7x (64 MiB / TC) -> 48 MiB limit; v5e / v6e (128 MiB) -> 64 MiB limit.
    limit = min((cap * 3) // 4, 64 * 1024 * 1024)
    budget = (limit * 3) // 4          # ~25% headroom for compiler temporaries
    return limit, budget


def _choose_tiling(b, n, c, itemsize, budget):
    """Pick (batch tile rows, N-chunk size) so the working set fits the budget."""
    # Per batch row, independent of N chunking:
    #   anchor + positive double-buffered, per-slice f32 temps, accum/out rows.
    fixed_per_row = 4 * c * itemsize + 2 * c * 4 + 32
    # Per batch row and per negative in the chunk (double-buffered HBM stream).
    neg_per_row_per_n = 2 * c * itemsize

    if b <= 128:
        tb = _round_up(max(b, 1), 8)               # single whole-batch tile
    else:
        # Lane-dense 128-multiple tiles; keep >=2 grid steps on the parallel
        # axis (v7x dual TensorCore) and never exceed the budget with full N.
        tb_cap = min(1024, 128 * max(1, -(-b // 256)))
        rows_full_n = budget // (fixed_per_row + n * neg_per_row_per_n)
        rows_full_n = (rows_full_n // 128) * 128
        tb = max(128, min(tb_cap, rows_full_n)) if rows_full_n >= 128 else 128

    avail = budget - tb * fixed_per_row
    n_chunk = max(1, min(n, avail // max(tb * neg_per_row_per_n, 1)))
    return int(tb), int(n_chunk)


def _supcon_loss_ref(anchor_audio, positive_video, negative_audio):
    # Pure-JAX reference mirroring the PyTorch code path (also the small-case path).
    pos = positive_video[None, :, :]                              # (1, B, C)
    contrast = jnp.concatenate([pos, negative_audio], axis=0)     # (1+N, B, C)
    sim = jnp.sum(anchor_audio[None, :, :] * contrast, -1) / TEMPERATURE
    sim = sim.T                                                   # (B, 1+N)
    logits = sim - jnp.max(sim, axis=1, keepdims=True)
    log_prob = logits - jnp.log(jnp.sum(jnp.exp(logits), axis=1, keepdims=True))
    loss = -(TEMPERATURE / BASE_TEMPERATURE) * log_prob[:, 0]
    return jnp.mean(loss)


def supcon_loss(anchor_audio, positive_video, negative_audio,
                block_rows=None, n_chunk=None, use_pallas=None):
    """anchor_audio: (B, C), positive_video: (B, C), negative_audio: (N, B, C)."""
    B, C = anchor_audio.shape
    N = negative_audio.shape[0]
    itemsize = jnp.dtype(anchor_audio.dtype).itemsize

    if use_pallas is None:
        # Tiny problems are call/grid-overhead bound: let fused XLA handle them.
        use_pallas = (N * B * C * itemsize) >= _SMALL_NEG_BYTES
    if not use_pallas:
        return _supcon_loss_ref(anchor_audio, positive_video, negative_audio)

    vmem_limit, budget = _vmem_budget()
    tb_auto, nc_auto = _choose_tiling(B, N, C, itemsize, budget)
    tb = tb_auto if block_rows is None else int(block_rows)
    nc = nc_auto if n_chunk is None else int(n_chunk)

    b_pad = _round_up(B, tb)
    if b_pad > tb and tb % 128 != 0:
        raise ValueError("block_rows must be a multiple of 128 when tiling the batch")
    n_pad = _round_up(N, nc)

    pad_b = b_pad - B
    pad_n = n_pad - N
    anchor, positive, negative = anchor_audio, positive_video, negative_audio
    if pad_b:
        # Zero rows give finite values and are sliced away before the mean.
        anchor = jnp.pad(anchor, ((0, pad_b), (0, 0)))
        positive = jnp.pad(positive, ((0, pad_b), (0, 0)))
    if pad_b or pad_n:
        # Padded negatives are masked to -BIG inside the kernel.
        negative = jnp.pad(negative, ((0, pad_n), (0, pad_b), (0, 0)))

    grid = (b_pad // tb, n_pad // nc)
    kernel = functools.partial(_supcon_kernel, n_total=N, need_mask=(n_pad != N))

    cost = pl.CostEstimate(
        flops=2 * (N + 1) * B * C,
        transcendentals=(N + 2) * B,
        bytes_accessed=(N + 2) * B * C * itemsize + 4 * B,
    )

    per_row_loss = pl.pallas_call(
        kernel,
        out_shape=jax.ShapeDtypeStruct((1, b_pad), jnp.float32),
        grid_spec=pltpu.PrefetchScalarGridSpec(
            num_scalar_prefetch=0,
            grid=grid,
            in_specs=[
                pl.BlockSpec((tb, C), lambda i, j: (i, 0)),
                pl.BlockSpec((tb, C), lambda i, j: (i, 0)),
                pl.BlockSpec((nc, tb, C), lambda i, j: (j, i, 0)),
            ],
            out_specs=pl.BlockSpec((1, tb), lambda i, j: (0, i)),
            scratch_shapes=[pltpu.VMEM((1, tb), jnp.float32)] * 3,
        ),
        compiler_params=pltpu.CompilerParams(
            dimension_semantics=("parallel", "arbitrary"),
            vmem_limit_bytes=int(vmem_limit),
        ),
        cost_estimate=cost,
    )(anchor, positive, negative)

    # Tiny final reduction over the B valid rows, done in plain JAX.
    return jnp.mean(per_row_loss[0, :B])


if __name__ == "__main__":
    key = jax.random.PRNGKey(0)

    def _norm(x):
        return x / jnp.linalg.norm(x, axis=-1, keepdims=True)

    cases = [
        dict(B=8, C=128, N=4),                        # single tile, no padding
        dict(B=6, C=32, N=3),                         # single tile, padded batch
        dict(B=200, C=128, N=3),                      # multi batch tile + padding
        dict(B=16, C=128, N=5, n_chunk=2),            # N-chunked grid + N padding/mask
    ]
    for cfg in cases:
        B, C, N = cfg["B"], cfg["C"], cfg["N"]
        key, k1, k2, k3 = jax.random.split(key, 4)
        anchor = _norm(jax.random.normal(k1, (B, C), dtype=jnp.float32))
        positive = _norm(jax.random.normal(k2, (B, C), dtype=jnp.float32))
        negative = _norm(jax.random.normal(k3, (N, B, C), dtype=jnp.float32))

        loss = supcon_loss(anchor, positive, negative,
                           n_chunk=cfg.get("n_chunk"), use_pallas=True)
        jax.block_until_ready(loss)
        ref = _supcon_loss_ref(anchor, positive, negative)
        assert jnp.allclose(loss, ref, rtol=1e-4, atol=1e-4), (cfg, float(loss), float(ref))

    print("KERNEL_OK")
</pallas_src>

<mosaic_0001>
module attributes {stable_mosaic.version = 11 : i64} {
  func.func @_supcon_kernel(%arg0: i32, %arg1: i32, %arg2: memref<8x128xf32, #tpu.memory_space<vmem>>, %arg3: memref<8x128xf32, #tpu.memory_space<vmem>>, %arg4: memref<4x8x128xf32, #tpu.memory_space<vmem>>, %arg5: memref<1x8xf32, #tpu.memory_space<vmem>>, %arg6: memref<1x8xf32, #tpu.memory_space<vmem>>, %arg7: memref<1x8xf32, #tpu.memory_space<vmem>>, %arg8: memref<1x8xf32, #tpu.memory_space<vmem>>) attributes {dimension_semantics = [#tpu.dimension_semantics<parallel>, #tpu.dimension_semantics<arbitrary>], iteration_bounds = array<i64: 1, 1>, scalar_prefetch = 0 : i64, scratch_operands = 3 : i64, tpu.core_type = #tpu.core_type<tc>, window_params = [{transform_indices = @transform_0, window_bounds = array<i64: 8, 128>}, {transform_indices = @transform_1, window_bounds = array<i64: 8, 128>}, {transform_indices = @transform_2, window_bounds = array<i64: 4, 8, 128>}, {transform_indices = @transform_3, window_bounds = array<i64: 1, 8>}]} {
    %c0 = arith.constant 0 : index
    %c0_0 = arith.constant 0 : index
    %0 = vector.load %arg2[%c0, %c0_0] : memref<8x128xf32, #tpu.memory_space<vmem>>, vector<8x128xf32>
    %c0_i32 = arith.constant 0 : i32
    %1 = arith.cmpi eq, %arg1, %c0_i32 : i32
    %2 = arith.extui %1 : i1 to i32
    %cst = arith.constant 14.2857141 : f32
    %c0_i32_1 = arith.constant 0 : i32
    %3 = arith.cmpi ne, %2, %c0_i32_1 : i32
    scf.if %3 {
      %c0_26 = arith.constant 0 : index
      %c0_27 = arith.constant 0 : index
      %71 = vector.load %arg3[%c0_26, %c0_27] : memref<8x128xf32, #tpu.memory_space<vmem>>, vector<8x128xf32>
      %72 = arith.mulf %0, %71 : vector<8x128xf32>
      %cst_28 = arith.constant dense<0.000000e+00> : vector<8xf32>
      %73 = vector.multi_reduction <add>, %72, %cst_28 [1] : vector<8x128xf32> to vector<8xf32>
      %74 = vector.broadcast %cst : f32 to vector<8xf32>
      %75 = arith.mulf %73, %74 : vector<8xf32>
      %76 = vector.shape_cast %75 : vector<8xf32> to vector<1x8xf32>
      %c0_29 = arith.constant 0 : index
      %c0_30 = arith.constant 0 : index
      %77 = vector.load %arg8[%c0_29, %c0_30] : memref<1x8xf32, #tpu.memory_space<vmem>>, vector<1x8xf32>
      tpu.vector_store %arg8[%c0_29, %c0_30], %76 {strides = array<i32>} : memref<1x8xf32, #tpu.memory_space<vmem>>, vector<1x8xf32>,
      %c0_31 = arith.constant 0 : index
      %c0_32 = arith.constant 0 : index
      %78 = vector.load %arg6[%c0_31, %c0_32] : memref<1x8xf32, #tpu.memory_space<vmem>>, vector<1x8xf32>
      tpu.vector_store %arg6[%c0_31, %c0_32], %76 {strides = array<i32>} : memref<1x8xf32, #tpu.memory_space<vmem>>, vector<1x8xf32>,
      %cst_33 = arith.constant 1.000000e+00 : f32
      %79 = vector.broadcast %cst_33 : f32 to vector<1x8xf32>
      %c0_34 = arith.constant 0 : index
      %c0_35 = arith.constant 0 : index
      %80 = vector.load %arg7[%c0_34, %c0_35] : memref<1x8xf32, #tpu.memory_space<vmem>>, vector<1x8xf32>
      tpu.vector_store %arg7[%c0_34, %c0_35], %79 {strides = array<i32>} : memref<1x8xf32, #tpu.memory_space<vmem>>, vector<1x8xf32>,
    } else {
    }
    %c0_2 = arith.constant 0 : index
    %c0_3 = arith.constant 0 : index
    %4 = vector.load %arg6[%c0_2, %c0_3] : memref<1x8xf32, #tpu.memory_space<vmem>>, vector<1x8xf32>
    %c0_4 = arith.constant 0 : index
    %c0_5 = arith.constant 0 : index
    %5 = vector.load %arg7[%c0_4, %c0_5] : memref<1x8xf32, #tpu.memory_space<vmem>>, vector<1x8xf32>
    %cst_6 = arith.constant 14.2857141 : f32
    %c0_i32_7 = arith.constant 0 : i32
    %6 = arith.index_cast %c0_i32_7 : i32 to index
    %c0_8 = arith.constant 0 : index
    %c0_9 = arith.constant 0 : index
    %7 = vector.load %arg4[%6, %c0_8, %c0_9] : memref<4x8x128xf32, #tpu.memory_space<vmem>>, vector<1x8x128xf32>
    %8 = vector.shape_cast %7 : vector<1x8x128xf32> to vector<8x128xf32>
    %9 = arith.mulf %8, %0 : vector<8x128xf32>
    %cst_10 = arith.constant dense<0.000000e+00> : vector<8xf32>
    %10 = vector.multi_reduction <add>, %9, %cst_10 [1] : vector<8x128xf32> to vector<8xf32>
    %11 = vector.broadcast %cst_6 : f32 to vector<8xf32>
    %12 = arith.mulf %10, %11 : vector<8xf32>
    %13 = vector.shape_cast %12 : vector<8xf32> to vector<1x8xf32>
    %14 = arith.maximumf %4, %13 : vector<1x8xf32>
    %15 = arith.subf %4, %14 : vector<1x8xf32>
    %16 = math.exp %15 : vector<1x8xf32>
    %17 = arith.mulf %5, %16 : vector<1x8xf32>
    %18 = arith.subf %13, %14 : vector<1x8xf32>
    %19 = math.exp %18 : vector<1x8xf32>
    %20 = arith.addf %17, %19 : vector<1x8xf32>
    %c1_i32 = arith.constant 1 : i32
    %21 = arith.index_cast %c1_i32 : i32 to index
    %c0_11 = arith.constant 0 : index
    %c0_12 = arith.constant 0 : index
    %22 = vector.load %arg4[%21, %c0_11, %c0_12] : memref<4x8x128xf32, #tpu.memory_space<vmem>>, vector<1x8x128xf32>
    %23 = vector.shape_cast %22 : vector<1x8x128xf32> to vector<8x128xf32>
    %24 = arith.mulf %23, %0 : vector<8x128xf32>
    %cst_13 = arith.constant dense<0.000000e+00> : vector<8xf32>
    %25 = vector.multi_reduction <add>, %24, %cst_13 [1] : vector<8x128xf32> to vector<8xf32>
    %26 = vector.broadcast %cst_6 : f32 to vector<8xf32>
    %27 = arith.mulf %25, %26 : vector<8xf32>
    %28 = vector.shape_cast %27 : vector<8xf32> to vector<1x8xf32>
    %29 = arith.maximumf %14, %28 : vector<1x8xf32>
    %30 = arith.subf %14, %29 : vector<1x8xf32>
    %31 = math.exp %30 : vector<1x8xf32>
    %32 = arith.mulf %20, %31 : vector<1x8xf32>
    %33 = arith.subf %28, %29 : vector<1x8xf32>
    %34 = math.exp %33 : vector<1x8xf32>
    %35 = arith.addf %32, %34 : vector<1x8xf32>
    %c2_i32 = arith.constant 2 : i32
    %36 = arith.index_cast %c2_i32 : i32 to index
    %c0_14 = arith.constant 0 : index
    %c0_15 = arith.constant 0 : index
    %37 = vector.load %arg4[%36, %c0_14, %c0_15] : memref<4x8x128xf32, #tpu.memory_space<vmem>>, vector<1x8x128xf32>
    %38 = vector.shape_cast %37 : vector<1x8x128xf32> to vector<8x128xf32>
    %39 = arith.mulf %38, %0 : vector<8x128xf32>
    %cst_16 = arith.constant dense<0.000000e+00> : vector<8xf32>
    %40 = vector.multi_reduction <add>, %39, %cst_16 [1] : vector<8x128xf32> to vector<8xf32>
    %41 = vector.broadcast %cst_6 : f32 to vector<8xf32>
    %42 = arith.mulf %40, %41 : vector<8xf32>
    %43 = vector.shape_cast %42 : vector<8xf32> to vector<1x8xf32>
    %44 = arith.maximumf %29, %43 : vector<1x8xf32>
    %45 = arith.subf %29, %44 : vector<1x8xf32>
    %46 = math.exp %45 : vector<1x8xf32>
    %47 = arith.mulf %35, %46 : vector<1x8xf32>
    %48 = arith.subf %43, %44 : vector<1x8xf32>
    %49 = math.exp %48 : vector<1x8xf32>
    %50 = arith.addf %47, %49 : vector<1x8xf32>
    %c3_i32 = arith.constant 3 : i32
    %51 = arith.index_cast %c3_i32 : i32 to index
    %c0_17 = arith.constant 0 : index
    %c0_18 = arith.constant 0 : index
    %52 = vector.load %arg4[%51, %c0_17, %c0_18] : memref<4x8x128xf32, #tpu.memory_space<vmem>>, vector<1x8x128xf32>
    %53 = vector.shape_cast %52 : vector<1x8x128xf32> to vector<8x128xf32>
    %54 = arith.mulf %53, %0 : vector<8x128xf32>
    %cst_19 = arith.constant dense<0.000000e+00> : vector<8xf32>
    %55 = vector.multi_reduction <add>, %54, %cst_19 [1] : vector<8x128xf32> to vector<8xf32>
    %56 = vector.broadcast %cst_6 : f32 to vector<8xf32>
    %57 = arith.mulf %55, %56 : vector<8xf32>
    %58 = vector.shape_cast %57 : vector<8xf32> to vector<1x8xf32>
    %59 = arith.maximumf %44, %58 : vector<1x8xf32>
    %60 = arith.subf %44, %59 : vector<1x8xf32>
    %61 = math.exp %60 : vector<1x8xf32>
    %62 = arith.mulf %50, %61 : vector<1x8xf32>
    %63 = arith.subf %58, %59 : vector<1x8xf32>
    %64 = math.exp %63 : vector<1x8xf32>
    %65 = arith.addf %62, %64 : vector<1x8xf32>
    %c4_i32 = arith.constant 4 : i32
    %c0_20 = arith.constant 0 : index
    %c0_21 = arith.constant 0 : index
    %66 = vector.load %arg6[%c0_20, %c0_21] : memref<1x8xf32, #tpu.memory_space<vmem>>, vector<1x8xf32>
    tpu.vector_store %arg6[%c0_20, %c0_21], %59 {strides = array<i32>} : memref<1x8xf32, #tpu.memory_space<vmem>>, vector<1x8xf32>,
    %c0_22 = arith.constant 0 : index
    %c0_23 = arith.constant 0 : index
    %67 = vector.load %arg7[%c0_22, %c0_23] : memref<1x8xf32, #tpu.memory_space<vmem>>, vector<1x8xf32>
    tpu.vector_store %arg7[%c0_22, %c0_23], %65 {strides = array<i32>} : memref<1x8xf32, #tpu.memory_space<vmem>>, vector<1x8xf32>,
    %c0_i32_24 = arith.constant 0 : i32
    %68 = arith.cmpi eq, %arg1, %c0_i32_24 : i32
    %69 = arith.extui %68 : i1 to i32
    %c0_i32_25 = arith.constant 0 : i32
    %70 = arith.cmpi ne, %69, %c0_i32_25 : i32
    scf.if %70 {
      %c0_26 = arith.constant 0 : index
      %c0_27 = arith.constant 0 : index
      %71 = vector.load %arg8[%c0_26, %c0_27] : memref<1x8xf32, #tpu.memory_space<vmem>>, vector<1x8xf32>
      %c0_28 = arith.constant 0 : index
      %c0_29 = arith.constant 0 : index
      %72 = vector.load %arg6[%c0_28, %c0_29] : memref<1x8xf32, #tpu.memory_space<vmem>>, vector<1x8xf32>
      %73 = arith.subf %71, %72 : vector<1x8xf32>
      %c0_30 = arith.constant 0 : index
      %c0_31 = arith.constant 0 : index
      %74 = vector.load %arg7[%c0_30, %c0_31] : memref<1x8xf32, #tpu.memory_space<vmem>>, vector<1x8xf32>
      %75 = math.log %74 : vector<1x8xf32>
      %76 = arith.subf %73, %75 : vector<1x8xf32>
      %cst_32 = arith.constant 0.000000e+00 : f32
      %cst_33 = arith.constant 1.000000e+00 : f32
      %77 = arith.subf %cst_32, %cst_33 : f32
      %78 = vector.broadcast %77 : f32 to vector<1x8xf32>
      %79 = arith.mulf %78, %76 : vector<1x8xf32>
      %c0_34 = arith.constant 0 : index
      %c0_35 = arith.constant 0 : index
      %80 = vector.load %arg5[%c0_34, %c0_35] : memref<1x8xf32, #tpu.memory_space<vmem>>, vector<1x8xf32>
      tpu.vector_store %arg5[%c0_34, %c0_35], %79 {strides = array<i32>} : memref<1x8xf32, #tpu.memory_space<vmem>>, vector<1x8xf32>,
    } else {
    }
    return
  }
  func.func @transform_0(%arg0: i32, %arg1: i32) -> (i32, i32) {
    %c0_i32 = arith.constant 0 : i32
    %c0_i32_0 = arith.constant 0 : i32
    return %arg0, %c0_i32 : i32, i32
  }
  func.func @transform_1(%arg0: i32, %arg1: i32) -> (i32, i32) {
    %c0_i32 = arith.constant 0 : i32
    %c0_i32_0 = arith.constant 0 : i32
    return %arg0, %c0_i32 : i32, i32
  }
  func.func @transform_2(%arg0: i32, %arg1: i32) -> (i32, i32, i32) {
    %c0_i32 = arith.constant 0 : i32
    %c0_i32_0 = arith.constant 0 : i32
    return %arg1, %arg0, %c0_i32 : i32, i32, i32
  }
  func.func @transform_3(%arg0: i32, %arg1: i32) -> (i32, i32) {
    %c0_i32 = arith.constant 0 : i32
    %c0_i32_0 = arith.constant 0 : i32
    return %c0_i32, %arg0 : i32, i32
  }
}

</mosaic_0001>

<llo_original>
// kernel: tpu_custom_call.1
$region0: #{tpu_custom_call.1}
  #allocation0 [shape = 'u32[]', space=smem, size = 0x4, offset = 0x4, fixed_abs, tag = 'smem constant byte address 0x4 - core index']
  #allocation1 [shape = 'u32[144,128]{1,0:T(1,128)}', space=vmem, size = 0x12000, scoped, tag = 'internal scratch']
  #allocation2 [shape = 'f32[1,8]{1,0:T(1,128)}', space=vmem, size = 0x200, scoped, tag = 'scratch operand']
  #allocation3 [shape = 'f32[1,8]{1,0:T(1,128)}', space=vmem, size = 0x200, scoped, tag = 'scratch operand']
  #allocation4 [shape = 'f32[1,8]{1,0:T(1,128)}', space=vmem, size = 0x200, scoped, tag = 'scratch operand']
  %s0 = inlined_call_operand.hbm [shape: f32[8,128], index: 0, kind: input, shape index: {}]
  %s1 = inlined_call_operand.hbm [shape: f32[8,128], index: 1, kind: input, shape index: {}]
  %s2 = inlined_call_operand.hbm [shape: f32[4,8,128], index: 2, kind: input, shape index: {}]
  %s3 = inlined_call_operand.hbm [shape: f32[1,8], index: 3, kind: output, shape index: {}]
  %s4 = sld [smem:[#allocation0]]
  $region42: #{tpu_custom_call.1} parent=0
    _
  %s6 = ssub.s32 1, %s4
  %s7 = scalar_select 0, %s6, %s4
  $region1: #{tpu_custom_call.1} parent=0
    #allocation5 [shape = 'u8[4096]{0}', space=vmem, size = 0x1000, scoped, tag = 'input window, operand 0, single buffered']
    #allocation6 [shape = 's32[1]{0}', space=sflag, size = 0x4, scoped, tag = 'scoped memory for tpu_custom_call.1']
    #allocation7 [shape = 's32[1]{0}', space=sflag, size = 0x4, scoped, tag = 'scoped memory for tpu_custom_call.1']
    #allocation8 [shape = 'u8[4096]{0}', space=vmem, size = 0x1000, scoped, tag = 'input window, operand 1, single buffered']
    #allocation9 [shape = 's32[1]{0}', space=sflag, size = 0x4, scoped, tag = 'scoped memory for tpu_custom_call.1']
    #allocation10 [shape = 'u8[16384]{0}', space=vmem, size = 0x4000, scoped, tag = 'input window, operand 2, single buffered']
    #allocation11 [shape = 'u8[512]{0}', space=vmem, size = 0x400, scoped, tag = 'output window, operand 0, single buffered']
    %8 = vsyncpa [#allocation6], 0
    %9 = vsyncpa [#allocation9], 0
    %10 = vsyncpa [#allocation7], 0
    // Predicated region
    $region2: #{tpu_custom_call.1} parent=1 // pred_check
      _
    $region3: #{tpu_custom_call.1} parent=1 // pred_check_branch
      %12 = sbr.rel (0) target = $region5
    $region4: #{tpu_custom_call.1} parent=1 // pred_region
      %s14 = ssub.s32 128, 128
      %15 = vsyncadd [#allocation6], %s14
      %s17 = sshll.u32 [#allocation5], 4
      %s18 = int_to_ptr.vmem [resolvable:$true] %s17
      %20 = dma.hbm_to_vmem [thread:$0]  %s0, 128, %s18, [#allocation6]
    $region5: #{tpu_custom_call.1} parent=1 // pred_fallthru
      _
    // Predicated region
    $region6: #{tpu_custom_call.1} parent=1 // pred_check
      _
    $region7: #{tpu_custom_call.1} parent=1 // pred_check_branch
      %22 = sbr.rel (0) target = $region9
    $region8: #{tpu_custom_call.1} parent=1 // pred_region
      %s24 = ssub.s32 128, 128
      %25 = vsyncadd [#allocation9], %s24
      %s27 = sshll.u32 [#allocation8], 4
      %s28 = int_to_ptr.vmem [resolvable:$true] %s27
      %30 = dma.hbm_to_vmem [thread:$0]  %s1, 128, %s28, [#allocation9]
    $region9: #{tpu_custom_call.1} parent=1 // pred_fallthru
      _
    // Predicated region
    $region10: #{tpu_custom_call.1} parent=1 // pred_check
      _
    $region11: #{tpu_custom_call.1} parent=1 // pred_check_branch
      %32 = sbr.rel (0) target = $region13
    $region12: #{tpu_custom_call.1} parent=1 // pred_region
      %s34 = ssub.s32 512, 512
      %35 = vsyncadd [#allocation9], %s34
      %s36 = sshll.u32 [#allocation10], 4
      %s37 = int_to_ptr.vmem [resolvable:$true] %s36
      %42 = dma.hbm_to_vmem [thread:$0]  %s2, 512, %s37, [#allocation9], 128, 128, 8
    $region13: #{tpu_custom_call.1} parent=1 // pred_fallthru
      _
    // Predicated region
    $region14: #{tpu_custom_call.1} parent=1 // pred_check
      _
    $region15: #{tpu_custom_call.1} parent=1 // pred_check_branch
      %44 = sbr.rel (0) target = $region17
    $region16: #{tpu_custom_call.1} parent=1 // pred_region
      %45 = dma.done [#allocation6], 128
    $region17: #{tpu_custom_call.1} parent=1 // pred_fallthru
      _
    // Predicated region
    $region18: #{tpu_custom_call.1} parent=1 // pred_check
      _
    $region19: #{tpu_custom_call.1} parent=1 // pred_check_branch
      %47 = sbr.rel (0) target = $region21
    $region20: #{tpu_custom_call.1} parent=1 // pred_region
      %48 = dma.done [#allocation9], 128
    $region21: #{tpu_custom_call.1} parent=1 // pred_fallthru
      _
    // Predicated region
    $region22: #{tpu_custom_call.1} parent=1 // pred_check
      _
    $region23: #{tpu_custom_call.1} parent=1 // pred_check_branch
      %50 = sbr.rel (0) target = $region25
    $region24: #{tpu_custom_call.1} parent=1 // pred_region
      %51 = dma.done [#allocation9], 512
    $region25: #{tpu_custom_call.1} parent=1 // pred_fallthru
      _
    %v52 = vld [vmem:[#allocation5] sm:$0xff]
    %p53 = scmp.eq.s32.totalorder 0, 0
    // Predicated region
    $region26: #{tpu_custom_call.1} parent=1 // pred_check
      %p54 = pneg %p53
    $region27: #{tpu_custom_call.1} parent=1 // pred_check_branch
      %56 = sbr.rel (%p54) target = $region29
    $region28: #{tpu_custom_call.1} parent=1 // pred_region
      %v57 = vld [vmem:[#allocation8] sm:$0xff]
      %v58 = vmul.f32 %v52, %v57
      %59 = vadd.xlane.f32.xlu0 %v58
      %v60 = vpop.xlane.xlu0 %59
      %v61 = vmul.f32 %v60, 14.285714
      %v63 = vlaneseq
      %v64 = vand.u32 %v63, 127
      %v65 = vlaneseq
      %v66 = vshrl.u32 %v65, 7
      %v67 = vsub.s32 %v64, %v66
      %v68 = vrot.slane %v61, %v67
      %vm70 = vcmask 57344
      %71 = vst.msk [vmem:[#allocation4] sm:$0x1] %vm70, %v68
      %72 = vst.msk [vmem:[#allocation2] sm:$0x1] %vm70, %v68
      %73 = vst.msk [vmem:[#allocation3] sm:$0x1] %vm70, 1.0
    $region29: #{tpu_custom_call.1} parent=1 // pred_fallthru
      _
    %v74 = vld [vmem:[#allocation2] sm:$0x1]
    %v75 = vld [vmem:[#allocation3] sm:$0x1]
    %v76 = vld [vmem:[#allocation10] sm:$0xff]
    %v77 = vmul.f32 %v76, %v52
    %78 = vadd.xlane.f32.xlu0 %v77
    %v79 = vpop.xlane.xlu0 %78
    %v80 = vmul.f32 %v79, 14.285714
    %v82 = vlaneseq
    %v83 = vshrl.u32 %v82, 7
    %v84 = vsub.s32 0, %v83
    %v85 = vrot.slane %v80, %v84
    %v86 = vlaneseq
    %v87 = vshrl.u32 %v86, 7
    %v88 = vsub.s32 1, %v87
    %v89 = vrot.slane %v80, %v88
    %v90 = vlaneseq
    %v91 = vshrl.u32 %v90, 7
    %v92 = vsub.s32 2, %v91
    %v93 = vrot.slane %v80, %v92
    %v94 = vlaneseq
    %v95 = vshrl.u32 %v94, 7
    %v96 = vsub.s32 3, %v95
    %v97 = vrot.slane %v80, %v96
    %v98 = vlaneseq
    %v99 = vshrl.u32 %v98, 7
    %v100 = vsub.s32 4, %v99
    %v101 = vrot.slane %v80, %v100
    %v102 = vlaneseq
    %v103 = vshrl.u32 %v102, 7
    %v104 = vsub.s32 5, %v103
    %v105 = vrot.slane %v80, %v104
    %v106 = vlaneseq
    %v107 = vshrl.u32 %v106, 7
    %v108 = vsub.s32 6, %v107
    %v109 = vrot.slane %v80, %v108
    %v110 = vlaneseq
    %v111 = vshrl.u32 %v110, 7
    %v112 = vsub.s32 7, %v111
    %v113 = vrot.slane %v80, %v112
    %v114 = vcombine.low %v85, %v89
    %v115 = vcombine.low %v93, %v97
    %v116 = vcombine.low %v101, %v105
    %v117 = vcombine.low %v109, %v113
    %v119 = vunpack.c.l.s4 1966171168
    %v120 = vunpack.c.0.s8 %v119
    %v121 = vlaneseq
    %v122 = vshrl.u32 %v121, 7
    %v123 = vsub.s32 %v120, %v122
    %v124 = vrot.slane %v114, %v123
    %v126 = vunpack.c.l.s4 1966171168
    %v127 = vunpack.c.0.s8 %v126
    %v128 = vlaneseq
    %v129 = vshrl.u32 %v128, 7
    %v130 = vsub.s32 %v127, %v129
    %v131 = vrot.slane %v115, %v130
    %v133 = vunpack.c.l.s4 1966171168
    %v134 = vunpack.c.0.s8 %v133
    %v135 = vlaneseq
    %v136 = vshrl.u32 %v135, 7
    %v137 = vsub.s32 %v134, %v136
    %v138 = vrot.slane %v116, %v137
    %v140 = vunpack.c.l.s4 1966171168
    %v141 = vunpack.c.0.s8 %v140
    %v142 = vlaneseq
    %v143 = vshrl.u32 %v142, 7
    %v144 = vsub.s32 %v141, %v143
    %v145 = vrot.slane %v117, %v144
    %v146 = vcombine.low %v124, %v131
    %v147 = vcombine.low %v138, %v145
    %v149 = vunpack.c.l.s4 1966171168
    %v150 = vunpack.c.0.s8 %v149
    %v151 = vlaneseq
    %v152 = vshrl.u32 %v151, 7
    %v153 = vsub.s32 %v150, %v152
    %v154 = vrot.slane %v146, %v153
    %v156 = vunpack.c.l.s4 1966171168
    %v157 = vunpack.c.0.s8 %v156
    %v158 = vlaneseq
    %v159 = vshrl.u32 %v158, 7
    %v160 = vsub.s32 %v157, %v159
    %v161 = vrot.slane %v147, %v160
    %v162 = vcombine.low %v154, %v161
    %163 = vset.pattern.permute.xlu0 0
    %164 = vperm.xlu0 %163, %v162
    %v165 = vpop.permute.xlu0 %164
    %v166 = vlaneseq
    %v167 = vand.u32 %v166, 127
    %v168 = vlaneseq
    %v169 = vshrl.u32 %v168, 7
    %v170 = vsub.s32 %v167, %v169
    %v171 = vrot.slane %v165, %v170
    %v173 = vunpack.c.l.s4 1966171168
    %v174 = vunpack.c.0.s8 %v173
    %v175 = vlaneseq
    %v176 = vshrl.u32 %v175, 7
    %v177 = vsub.s32 %v174, %v176
    %v178 = vrot.slane %v171, %v177
    %v180 = vunpack.c.l.s4 1966171168
    %v181 = vunpack.c.0.s8 %v180
    %v182 = vlaneseq
    %v183 = vshrl.u32 %v182, 7
    %v184 = vsub.s32 %v181, %v183
    %v185 = vrot.slane %v178, %v184
    %v187 = vmax.f32 %v74, %v185
    %v188 = vsub.f32 %v74, %v187
    %v189 = vmul.f32 %v188, 1.442695
    %v190 = vpow.pop %v189
    %v191 = vmul.f32 %v75, %v190
    %v193 = vlaneseq
    %v194 = vshrl.u32 %v193, 7
    %v195 = vsub.s32 0, %v194
    %v196 = vrot.slane %v187, %v195
    %198 = vbcast.lane.b32.xlu0 %v196, 256
    %v199 = vpop.permute.xlu0 %198
    %v201 = vsub.f32 %v80, %v199
    %v202 = vmul.f32 %v201, 1.442695
    %v203 = vpow.pop %v202
    %v205 = vcombine.high %v203, %v203
    %v207 = vunpack.c.l.s4 1966171168
    %v208 = vunpack.c.0.s8 %v207
    %v209 = vlaneseq
    %v210 = vshrl.u32 %v209, 7
    %v211 = vsub.s32 %v208, %v210
    %v212 = vrot.slane %v203, %v211
    %v214 = vunpack.c.l.s4 1966171168
    %v215 = vunpack.c.0.s8 %v214
    %v216 = vlaneseq
    %v217 = vshrl.u32 %v216, 7
    %v218 = vsub.s32 %v215, %v217
    %v219 = vrot.slane %v205, %v218
    %v220 = vcombine.high %v212, %v212
    %v221 = vcombine.high %v219, %v219
    %v223 = vunpack.c.l.s4 1966171168
    %v224 = vunpack.c.0.s8 %v223
    %v225 = vlaneseq
    %v226 = vshrl.u32 %v225, 7
    %v227 = vsub.s32 %v224, %v226
    %v228 = vrot.slane %v212, %v227
    %v230 = vunpack.c.l.s4 1966171168
    %v231 = vunpack.c.0.s8 %v230
    %v232 = vlaneseq
    %v233 = vshrl.u32 %v232, 7
    %v234 = vsub.s32 %v231, %v233
    %v235 = vrot.slane %v219, %v234
    %v237 = vunpack.c.l.s4 1966171168
    %v238 = vunpack.c.0.s8 %v237
    %v239 = vlaneseq
    %v240 = vshrl.u32 %v239, 7
    %v241 = vsub.s32 %v238, %v240
    %v242 = vrot.slane %v220, %v241
    %v244 = vunpack.c.l.s4 1966171168
    %v245 = vunpack.c.0.s8 %v244
    %v246 = vlaneseq
    %v247 = vshrl.u32 %v246, 7
    %v248 = vsub.s32 %v245, %v247
    %v249 = vrot.slane %v221, %v248
    %v250 = vcombine.high %v228, %v228
    %v251 = vcombine.high %v235, %v235
    %v252 = vcombine.high %v242, %v242
    %v253 = vcombine.high %v249, %v249
    %v254 = vcombine.low %v228, %v242
    %v255 = vcombine.low %v250, %v252
    %v256 = vcombine.low %v235, %v249
    %v257 = vcombine.low %v251, %v253
    %v259 = vunpack.c.l.s4 1966171168
    %v260 = vunpack.c.0.s8 %v259
    %v261 = vlaneseq
    %v262 = vshrl.u32 %v261, 7
    %v263 = vsub.s32 %v260, %v262
    %v264 = vrot.slane %v254, %v263
    %v266 = vunpack.c.l.s4 1966171168
    %v267 = vunpack.c.0.s8 %v266
    %v268 = vlaneseq
    %v269 = vshrl.u32 %v268, 7
    %v270 = vsub.s32 %v267, %v269
    %v271 = vrot.slane %v255, %v270
    %v273 = vunpack.c.l.s4 1966171168
    %v274 = vunpack.c.0.s8 %v273
    %v275 = vlaneseq
    %v276 = vshrl.u32 %v275, 7
    %v277 = vsub.s32 %v274, %v276
    %v278 = vrot.slane %v256, %v277
    %v280 = vunpack.c.l.s4 1966171168
    %v281 = vunpack.c.0.s8 %v280
    %v282 = vlaneseq
    %v283 = vshrl.u32 %v282, 7
    %v284 = vsub.s32 %v281, %v283
    %v285 = vrot.slane %v257, %v284
    %v286 = vcombine.low %v264, %v271
    %v287 = vcombine.low %v278, %v285
    %v289 = vunpack.c.l.s4 1966171168
    %v290 = vunpack.c.0.s8 %v289
    %v291 = vlaneseq
    %v292 = vshrl.u32 %v291, 7
    %v293 = vsub.s32 %v290, %v292
    %v294 = vrot.slane %v286, %v293
    %v296 = vunpack.c.l.s4 1966171168
    %v297 = vunpack.c.0.s8 %v296
    %v298 = vlaneseq
    %v299 = vshrl.u32 %v298, 7
    %v300 = vsub.s32 %v297, %v299
    %v301 = vrot.slane %v287, %v300
    %v302 = vcombine.low %v294, %v301
    %303 = vset.pattern.permute.xlu0 0
    %304 = vperm.xlu0 %303, %v302
    %v305 = vpop.permute.xlu0 %304
    %v306 = vlaneseq
    %v307 = vshrl.u32 %v306, 7
    %v308 = vsub.s32 %v167, %v307
    %v309 = vrot.slane %v305, %v308
    %v311 = vunpack.c.l.s4 1966171168
    %v312 = vunpack.c.0.s8 %v311
    %v313 = vlaneseq
    %v314 = vshrl.u32 %v313, 7
    %v315 = vsub.s32 %v312, %v314
    %v316 = vrot.slane %v309, %v315
    %v318 = vunpack.c.l.s4 1966171168
    %v319 = vunpack.c.0.s8 %v318
    %v320 = vlaneseq
    %v321 = vshrl.u32 %v320, 7
    %v322 = vsub.s32 %v319, %v321
    %v323 = vrot.slane %v316, %v322
    %v325 = vadd.f32 %v191, %v323
    %s326 = scalar_lea.vmem [#allocation10], 8
    %v327 = vld [vmem:[%s326] sm:$0xff]
    %v328 = vmul.f32 %v327, %v52
    %329 = vadd.xlane.f32.xlu0 %v328
    %v330 = vpop.xlane.xlu0 %329
    %v331 = vmul.f32 %v330, 14.285714
    %v333 = vlaneseq
    %v334 = vshrl.u32 %v333, 7
    %v335 = vsub.s32 0, %v334
    %v336 = vrot.slane %v331, %v335
    %v337 = vlaneseq
    %v338 = vshrl.u32 %v337, 7
    %v339 = vsub.s32 1, %v338
    %v340 = vrot.slane %v331, %v339
    %v341 = vlaneseq
    %v342 = vshrl.u32 %v341, 7
    %v343 = vsub.s32 2, %v342
    %v344 = vrot.slane %v331, %v343
    %v345 = vlaneseq
    %v346 = vshrl.u32 %v345, 7
    %v347 = vsub.s32 3, %v346
    %v348 = vrot.slane %v331, %v347
    %v349 = vlaneseq
    %v350 = vshrl.u32 %v349, 7
    %v351 = vsub.s32 4, %v350
    %v352 = vrot.slane %v331, %v351
    %v353 = vlaneseq
    %v354 = vshrl.u32 %v353, 7
    %v355 = vsub.s32 5, %v354
    %v356 = vrot.slane %v331, %v355
    %v357 = vlaneseq
    %v358 = vshrl.u32 %v357, 7
    %v359 = vsub.s32 6, %v358
    %v360 = vrot.slane %v331, %v359
    %v361 = vlaneseq
    %v362 = vshrl.u32 %v361, 7
    %v363 = vsub.s32 7, %v362
    %v364 = vrot.slane %v331, %v363
    %v365 = vcombine.low %v336, %v340
    %v366 = vcombine.low %v344, %v348
    %v367 = vcombine.low %v352, %v356
    %v368 = vcombine.low %v360, %v364
    %v370 = vunpack.c.l.s4 1966171168
    %v371 = vunpack.c.0.s8 %v370
    %v372 = vlaneseq
    %v373 = vshrl.u32 %v372, 7
    %v374 = vsub.s32 %v371, %v373
    %v375 = vrot.slane %v365, %v374
    %v377 = vunpack.c.l.s4 1966171168
    %v378 = vunpack.c.0.s8 %v377
    %v379 = vlaneseq
    %v380 = vshrl.u32 %v379, 7
    %v381 = vsub.s32 %v378, %v380
    %v382 = vrot.slane %v366, %v381
    %v384 = vunpack.c.l.s4 1966171168
    %v385 = vunpack.c.0.s8 %v384
    %v386 = vlaneseq
    %v387 = vshrl.u32 %v386, 7
    %v388 = vsub.s32 %v385, %v387
    %v389 = vrot.slane %v367, %v388
    %v391 = vunpack.c.l.s4 1966171168
    %v392 = vunpack.c.0.s8 %v391
    %v393 = vlaneseq
    %v394 = vshrl.u32 %v393, 7
    %v395 = vsub.s32 %v392, %v394
    %v396 = vrot.slane %v368, %v395
    %v397 = vcombine.low %v375, %v382
    %v398 = vcombine.low %v389, %v396
    %v400 = vunpack.c.l.s4 1966171168
    %v401 = vunpack.c.0.s8 %v400
    %v402 = vlaneseq
    %v403 = vshrl.u32 %v402, 7
    %v404 = vsub.s32 %v401, %v403
    %v405 = vrot.slane %v397, %v404
    %v407 = vunpack.c.l.s4 1966171168
    %v408 = vunpack.c.0.s8 %v407
    %v409 = vlaneseq
    %v410 = vshrl.u32 %v409, 7
    %v411 = vsub.s32 %v408, %v410
    %v412 = vrot.slane %v398, %v411
    %v413 = vcombine.low %v405, %v412
    %414 = vset.pattern.permute.xlu0 0
    %415 = vperm.xlu0 %414, %v413
    %v416 = vpop.permute.xlu0 %415
    %v417 = vlaneseq
    %v418 = vshrl.u32 %v417, 7
    %v419 = vsub.s32 %v167, %v418
    %v420 = vrot.slane %v416, %v419
    %v422 = vunpack.c.l.s4 1966171168
    %v423 = vunpack.c.0.s8 %v422
    %v424 = vlaneseq
    %v425 = vshrl.u32 %v424, 7
    %v426 = vsub.s32 %v423, %v425
    %v427 = vrot.slane %v420, %v426
    %v429 = vunpack.c.l.s4 1966171168
    %v430 = vunpack.c.0.s8 %v429
    %v431 = vlaneseq
    %v432 = vshrl.u32 %v431, 7
    %v433 = vsub.s32 %v430, %v432
    %v434 = vrot.slane %v427, %v433
    %v436 = vmax.f32 %v187, %v434
    %v437 = vsub.f32 %v187, %v436
    %v438 = vmul.f32 %v437, 1.442695
    %v439 = vpow.pop %v438
    %v440 = vmul.f32 %v325, %v439
    %v442 = vlaneseq
    %v443 = vshrl.u32 %v442, 7
    %v444 = vsub.s32 0, %v443
    %v445 = vrot.slane %v436, %v444
    %447 = vbcast.lane.b32.xlu0 %v445, 256
    %v448 = vpop.permute.xlu0 %447
    %v450 = vsub.f32 %v331, %v448
    %v451 = vmul.f32 %v450, 1.442695
    %v452 = vpow.pop %v451
    %v454 = vcombine.high %v452, %v452
    %v456 = vunpack.c.l.s4 1966171168
    %v457 = vunpack.c.0.s8 %v456
    %v458 = vlaneseq
    %v459 = vshrl.u32 %v458, 7
    %v460 = vsub.s32 %v457, %v459
    %v461 = vrot.slane %v452, %v460
    %v463 = vunpack.c.l.s4 1966171168
    %v464 = vunpack.c.0.s8 %v463
    %v465 = vlaneseq
    %v466 = vshrl.u32 %v465, 7
    %v467 = vsub.s32 %v464, %v466
    %v468 = vrot.slane %v454, %v467
    %v469 = vcombine.high %v461, %v461
    %v470 = vcombine.high %v468, %v468
    %v472 = vunpack.c.l.s4 1966171168
    %v473 = vunpack.c.0.s8 %v472
    %v474 = vlaneseq
    %v475 = vshrl.u32 %v474, 7
    %v476 = vsub.s32 %v473, %v475
    %v477 = vrot.slane %v461, %v476
    %v479 = vunpack.c.l.s4 1966171168
    %v480 = vunpack.c.0.s8 %v479
    %v481 = vlaneseq
    %v482 = vshrl.u32 %v481, 7
    %v483 = vsub.s32 %v480, %v482
    %v484 = vrot.slane %v468, %v483
    %v486 = vunpack.c.l.s4 1966171168
    %v487 = vunpack.c.0.s8 %v486
    %v488 = vlaneseq
    %v489 = vshrl.u32 %v488, 7
    %v490 = vsub.s32 %v487, %v489
    %v491 = vrot.slane %v469, %v490
    %v493 = vunpack.c.l.s4 1966171168
    %v494 = vunpack.c.0.s8 %v493
    %v495 = vlaneseq
    %v496 = vshrl.u32 %v495, 7
    %v497 = vsub.s32 %v494, %v496
    %v498 = vrot.slane %v470, %v497
    %v499 = vcombine.high %v477, %v477
    %v500 = vcombine.high %v484, %v484
    %v501 = vcombine.high %v491, %v491
    %v502 = vcombine.high %v498, %v498
    %v503 = vcombine.low %v477, %v491
    %v504 = vcombine.low %v499, %v501
    %v505 = vcombine.low %v484, %v498
    %v506 = vcombine.low %v500, %v502
    %v508 = vunpack.c.l.s4 1966171168
    %v509 = vunpack.c.0.s8 %v508
    %v510 = vlaneseq
    %v511 = vshrl.u32 %v510, 7
    %v512 = vsub.s32 %v509, %v511
    %v513 = vrot.slane %v503, %v512
    %v515 = vunpack.c.l.s4 1966171168
    %v516 = vunpack.c.0.s8 %v515
    %v517 = vlaneseq
    %v518 = vshrl.u32 %v517, 7
    %v519 = vsub.s32 %v516, %v518
    %v520 = vrot.slane %v504, %v519
    %v522 = vunpack.c.l.s4 1966171168
    %v523 = vunpack.c.0.s8 %v522
    %v524 = vlaneseq
    %v525 = vshrl.u32 %v524, 7
    %v526 = vsub.s32 %v523, %v525
    %v527 = vrot.slane %v505, %v526
    %v529 = vunpack.c.l.s4 1966171168
    %v530 = vunpack.c.0.s8 %v529
    %v531 = vlaneseq
    %v532 = vshrl.u32 %v531, 7
    %v533 = vsub.s32 %v530, %v532
    %v534 = vrot.slane %v506, %v533
    %v535 = vcombine.low %v513, %v520
    %v536 = vcombine.low %v527, %v534
    %v538 = vunpack.c.l.s4 1966171168
    %v539 = vunpack.c.0.s8 %v538
    %v540 = vlaneseq
    %v541 = vshrl.u32 %v540, 7
    %v542 = vsub.s32 %v539, %v541
    %v543 = vrot.slane %v535, %v542
    %v545 = vunpack.c.l.s4 1966171168
    %v546 = vunpack.c.0.s8 %v545
    %v547 = vlaneseq
    %v548 = vshrl.u32 %v547, 7
    %v549 = vsub.s32 %v546, %v548
    %v550 = vrot.slane %v536, %v549
    %v551 = vcombine.low %v543, %v550
    %552 = vset.pattern.permute.xlu0 0
    %553 = vperm.xlu0 %552, %v551
    %v554 = vpop.permute.xlu0 %553
    %v555 = vlaneseq
    %v556 = vshrl.u32 %v555, 7
    %v557 = vsub.s32 %v167, %v556
    %v558 = vrot.slane %v554, %v557
    %v560 = vunpack.c.l.s4 1966171168
    %v561 = vunpack.c.0.s8 %v560
    %v562 = vlaneseq
    %v563 = vshrl.u32 %v562, 7
    %v564 = vsub.s32 %v561, %v563
    %v565 = vrot.slane %v558, %v564
    %v567 = vunpack.c.l.s4 1966171168
    %v568 = vunpack.c.0.s8 %v567
    %v569 = vlaneseq
    %v570 = vshrl.u32 %v569, 7
    %v571 = vsub.s32 %v568, %v570
    %v572 = vrot.slane %v565, %v571
    %v574 = vadd.f32 %v440, %v572
    %s575 = scalar_lea.vmem [#allocation10], 16
    %v576 = vld [vmem:[%s575] sm:$0xff]
    %v577 = vmul.f32 %v576, %v52
    %578 = vadd.xlane.f32.xlu0 %v577
    %v579 = vpop.xlane.xlu0 %578
    %v580 = vmul.f32 %v579, 14.285714
    %v582 = vlaneseq
    %v583 = vshrl.u32 %v582, 7
    %v584 = vsub.s32 0, %v583
    %v585 = vrot.slane %v580, %v584
    %v586 = vlaneseq
    %v587 = vshrl.u32 %v586, 7
    %v588 = vsub.s32 1, %v587
    %v589 = vrot.slane %v580, %v588
    %v590 = vlaneseq
    %v591 = vshrl.u32 %v590, 7
    %v592 = vsub.s32 2, %v591
    %v593 = vrot.slane %v580, %v592
    %v594 = vlaneseq
    %v595 = vshrl.u32 %v594, 7
    %v596 = vsub.s32 3, %v595
    %v597 = vrot.slane %v580, %v596
    %v598 = vlaneseq
    %v599 = vshrl.u32 %v598, 7
    %v600 = vsub.s32 4, %v599
    %v601 = vrot.slane %v580, %v600
    %v602 = vlaneseq
    %v603 = vshrl.u32 %v602, 7
    %v604 = vsub.s32 5, %v603
    %v605 = vrot.slane %v580, %v604
    %v606 = vlaneseq
    %v607 = vshrl.u32 %v606, 7
    %v608 = vsub.s32 6, %v607
    %v609 = vrot.slane %v580, %v608
    %v610 = vlaneseq
    %v611 = vshrl.u32 %v610, 7
    %v612 = vsub.s32 7, %v611
    %v613 = vrot.slane %v580, %v612
    %v614 = vcombine.low %v585, %v589
    %v615 = vcombine.low %v593, %v597
    %v616 = vcombine.low %v601, %v605
    %v617 = vcombine.low %v609, %v613
    %v619 = vunpack.c.l.s4 1966171168
    %v620 = vunpack.c.0.s8 %v619
    %v621 = vlaneseq
    %v622 = vshrl.u32 %v621, 7
    %v623 = vsub.s32 %v620, %v622
    %v624 = vrot.slane %v614, %v623
    %v626 = vunpack.c.l.s4 1966171168
    %v627 = vunpack.c.0.s8 %v626
    %v628 = vlaneseq
    %v629 = vshrl.u32 %v628, 7
    %v630 = vsub.s32 %v627, %v629
    %v631 = vrot.slane %v615, %v630
    %v633 = vunpack.c.l.s4 1966171168
    %v634 = vunpack.c.0.s8 %v633
    %v635 = vlaneseq
    %v636 = vshrl.u32 %v635, 7
    %v637 = vsub.s32 %v634, %v636
    %v638 = vrot.slane %v616, %v637
    %v640 = vunpack.c.l.s4 1966171168
    %v641 = vunpack.c.0.s8 %v640
    %v642 = vlaneseq
    %v643 = vshrl.u32 %v642, 7
    %v644 = vsub.s32 %v641, %v643
    %v645 = vrot.slane %v617, %v644
    %v646 = vcombine.low %v624, %v631
    %v647 = vcombine.low %v638, %v645
    %v649 = vunpack.c.l.s4 1966171168
    %v650 = vunpack.c.0.s8 %v649
    %v651 = vlaneseq
    %v652 = vshrl.u32 %v651, 7
    %v653 = vsub.s32 %v650, %v652
    %v654 = vrot.slane %v646, %v653
    %v656 = vunpack.c.l.s4 1966171168
    %v657 = vunpack.c.0.s8 %v656
    %v658 = vlaneseq
    %v659 = vshrl.u32 %v658, 7
    %v660 = vsub.s32 %v657, %v659
    %v661 = vrot.slane %v647, %v660
    %v662 = vcombine.low %v654, %v661
    %663 = vset.pattern.permute.xlu0 0
    %664 = vperm.xlu0 %663, %v662
    %v665 = vpop.permute.xlu0 %664
    %v666 = vlaneseq
    %v667 = vshrl.u32 %v666, 7
    %v668 = vsub.s32 %v167, %v667
    %v669 = vrot.slane %v665, %v668
    %v671 = vunpack.c.l.s4 1966171168
    %v672 = vunpack.c.0.s8 %v671
    %v673 = vlaneseq
    %v674 = vshrl.u32 %v673, 7
    %v675 = vsub.s32 %v672, %v674
    %v676 = vrot.slane %v669, %v675
    %v678 = vunpack.c.l.s4 1966171168
    %v679 = vunpack.c.0.s8 %v678
    %v680 = vlaneseq
    %v681 = vshrl.u32 %v680, 7
    %v682 = vsub.s32 %v679, %v681
    %v683 = vrot.slane %v676, %v682
    %v685 = vmax.f32 %v436, %v683
    %v686 = vsub.f32 %v436, %v685
    %v687 = vmul.f32 %v686, 1.442695
    %v688 = vpow.pop %v687
    %v689 = vmul.f32 %v574, %v688
    %v691 = vlaneseq
    %v692 = vshrl.u32 %v691, 7
    %v693 = vsub.s32 0, %v692
    %v694 = vrot.slane %v685, %v693
    %696 = vbcast.lane.b32.xlu0 %v694, 256
    %v697 = vpop.permute.xlu0 %696
    %v699 = vsub.f32 %v580, %v697
    %v700 = vmul.f32 %v699, 1.442695
    %v701 = vpow.pop %v700
    %v703 = vcombine.high %v701, %v701
    %v705 = vunpack.c.l.s4 1966171168
    %v706 = vunpack.c.0.s8 %v705
    %v707 = vlaneseq
    %v708 = vshrl.u32 %v707, 7
    %v709 = vsub.s32 %v706, %v708
    %v710 = vrot.slane %v701, %v709
    %v712 = vunpack.c.l.s4 1966171168
    %v713 = vunpack.c.0.s8 %v712
    %v714 = vlaneseq
    %v715 = vshrl.u32 %v714, 7
    %v716 = vsub.s32 %v713, %v715
    %v717 = vrot.slane %v703, %v716
    %v718 = vcombine.high %v710, %v710
    %v719 = vcombine.high %v717, %v717
    %v721 = vunpack.c.l.s4 1966171168
    %v722 = vunpack.c.0.s8 %v721
    %v723 = vlaneseq
    %v724 = vshrl.u32 %v723, 7
    %v725 = vsub.s32 %v722, %v724
    %v726 = vrot.slane %v710, %v725
    %v728 = vunpack.c.l.s4 1966171168
    %v729 = vunpack.c.0.s8 %v728
    %v730 = vlaneseq
    %v731 = vshrl.u32 %v730, 7
    %v732 = vsub.s32 %v729, %v731
    %v733 = vrot.slane %v717, %v732
    %v735 = vunpack.c.l.s4 1966171168
    %v736 = vunpack.c.0.s8 %v735
    %v737 = vlaneseq
    %v738 = vshrl.u32 %v737, 7
    %v739 = vsub.s32 %v736, %v738
    %v740 = vrot.slane %v718, %v739
    %v742 = vunpack.c.l.s4 1966171168
    %v743 = vunpack.c.0.s8 %v742
    %v744 = vlaneseq
    %v745 = vshrl.u32 %v744, 7
    %v746 = vsub.s32 %v743, %v745
    %v747 = vrot.slane %v719, %v746
    %v748 = vcombine.high %v726, %v726
    %v749 = vcombine.high %v733, %v733
    %v750 = vcombine.high %v740, %v740
    %v751 = vcombine.high %v747, %v747
    %v752 = vcombine.low %v726, %v740
    %v753 = vcombine.low %v748, %v750
    %v754 = vcombine.low %v733, %v747
    %v755 = vcombine.low %v749, %v751
    %v757 = vunpack.c.l.s4 1966171168
    %v758 = vunpack.c.0.s8 %v757
    %v759 = vlaneseq
    %v760 = vshrl.u32 %v759, 7
    %v761 = vsub.s32 %v758, %v760
    %v762 = vrot.slane %v752, %v761
    %v764 = vunpack.c.l.s4 1966171168
    %v765 = vunpack.c.0.s8 %v764
    %v766 = vlaneseq
    %v767 = vshrl.u32 %v766, 7
    %v768 = vsub.s32 %v765, %v767
    %v769 = vrot.slane %v753, %v768
    %v771 = vunpack.c.l.s4 1966171168
    %v772 = vunpack.c.0.s8 %v771
    %v773 = vlaneseq
    %v774 = vshrl.u32 %v773, 7
    %v775 = vsub.s32 %v772, %v774
    %v776 = vrot.slane %v754, %v775
    %v778 = vunpack.c.l.s4 1966171168
    %v779 = vunpack.c.0.s8 %v778
    %v780 = vlaneseq
    %v781 = vshrl.u32 %v780, 7
    %v782 = vsub.s32 %v779, %v781
    %v783 = vrot.slane %v755, %v782
    %v784 = vcombine.low %v762, %v769
    %v785 = vcombine.low %v776, %v783
    %v787 = vunpack.c.l.s4 1966171168
    %v788 = vunpack.c.0.s8 %v787
    %v789 = vlaneseq
    %v790 = vshrl.u32 %v789, 7
    %v791 = vsub.s32 %v788, %v790
    %v792 = vrot.slane %v784, %v791
    %v794 = vunpack.c.l.s4 1966171168
    %v795 = vunpack.c.0.s8 %v794
    %v796 = vlaneseq
    %v797 = vshrl.u32 %v796, 7
    %v798 = vsub.s32 %v795, %v797
    %v799 = vrot.slane %v785, %v798
    %v800 = vcombine.low %v792, %v799
    %801 = vset.pattern.permute.xlu0 0
    %802 = vperm.xlu0 %801, %v800
    %v803 = vpop.permute.xlu0 %802
    %v804 = vlaneseq
    %v805 = vshrl.u32 %v804, 7
    %v806 = vsub.s32 %v167, %v805
    %v807 = vrot.slane %v803, %v806
    %v809 = vunpack.c.l.s4 1966171168
    %v810 = vunpack.c.0.s8 %v809
    %v811 = vlaneseq
    %v812 = vshrl.u32 %v811, 7
    %v813 = vsub.s32 %v810, %v812
    %v814 = vrot.slane %v807, %v813
    %v816 = vunpack.c.l.s4 1966171168
    %v817 = vunpack.c.0.s8 %v816
    %v818 = vlaneseq
    %v819 = vshrl.u32 %v818, 7
    %v820 = vsub.s32 %v817, %v819
    %v821 = vrot.slane %v814, %v820
    %v823 = vadd.f32 %v689, %v821
    %s824 = scalar_lea.vmem [#allocation10], 24
    %v825 = vld [vmem:[%s824] sm:$0xff]
    %v826 = vmul.f32 %v825, %v52
    %827 = vadd.xlane.f32.xlu0 %v826
    %v828 = vpop.xlane.xlu0 %827
    %v829 = vmul.f32 %v828, 14.285714
    %v831 = vlaneseq
    %v832 = vshrl.u32 %v831, 7
    %v833 = vsub.s32 0, %v832
    %v834 = vrot.slane %v829, %v833
    %v835 = vlaneseq
    %v836 = vshrl.u32 %v835, 7
    %v837 = vsub.s32 1, %v836
    %v838 = vrot.slane %v829, %v837
    %v839 = vlaneseq
    %v840 = vshrl.u32 %v839, 7
    %v841 = vsub.s32 2, %v840
    %v842 = vrot.slane %v829, %v841
    %v843 = vlaneseq
    %v844 = vshrl.u32 %v843, 7
    %v845 = vsub.s32 3, %v844
    %v846 = vrot.slane %v829, %v845
    %v847 = vlaneseq
    %v848 = vshrl.u32 %v847, 7
    %v849 = vsub.s32 4, %v848
    %v850 = vrot.slane %v829, %v849
    %v851 = vlaneseq
    %v852 = vshrl.u32 %v851, 7
    %v853 = vsub.s32 5, %v852
    %v854 = vrot.slane %v829, %v853
    %v855 = vlaneseq
    %v856 = vshrl.u32 %v855, 7
    %v857 = vsub.s32 6, %v856
    %v858 = vrot.slane %v829, %v857
    %v859 = vlaneseq
    %v860 = vshrl.u32 %v859, 7
    %v861 = vsub.s32 7, %v860
    %v862 = vrot.slane %v829, %v861
    %v863 = vcombine.low %v834, %v838
    %v864 = vcombine.low %v842, %v846
    %v865 = vcombine.low %v850, %v854
    %v866 = vcombine.low %v858, %v862
    %v868 = vunpack.c.l.s4 1966171168
    %v869 = vunpack.c.0.s8 %v868
    %v870 = vlaneseq
    %v871 = vshrl.u32 %v870, 7
    %v872 = vsub.s32 %v869, %v871
    %v873 = vrot.slane %v863, %v872
    %v875 = vunpack.c.l.s4 1966171168
    %v876 = vunpack.c.0.s8 %v875
    %v877 = vlaneseq
    %v878 = vshrl.u32 %v877, 7
    %v879 = vsub.s32 %v876, %v878
    %v880 = vrot.slane %v864, %v879
    %v882 = vunpack.c.l.s4 1966171168
    %v883 = vunpack.c.0.s8 %v882
    %v884 = vlaneseq
    %v885 = vshrl.u32 %v884, 7
    %v886 = vsub.s32 %v883, %v885
    %v887 = vrot.slane %v865, %v886
    %v889 = vunpack.c.l.s4 1966171168
    %v890 = vunpack.c.0.s8 %v889
    %v891 = vlaneseq
    %v892 = vshrl.u32 %v891, 7
    %v893 = vsub.s32 %v890, %v892
    %v894 = vrot.slane %v866, %v893
    %v895 = vcombine.low %v873, %v880
    %v896 = vcombine.low %v887, %v894
    %v898 = vunpack.c.l.s4 1966171168
    %v899 = vunpack.c.0.s8 %v898
    %v900 = vlaneseq
    %v901 = vshrl.u32 %v900, 7
    %v902 = vsub.s32 %v899, %v901
    %v903 = vrot.slane %v895, %v902
    %v905 = vunpack.c.l.s4 1966171168
    %v906 = vunpack.c.0.s8 %v905
    %v907 = vlaneseq
    %v908 = vshrl.u32 %v907, 7
    %v909 = vsub.s32 %v906, %v908
    %v910 = vrot.slane %v896, %v909
    %v911 = vcombine.low %v903, %v910
    %912 = vset.pattern.permute.xlu0 0
    %913 = vperm.xlu0 %912, %v911
    %v914 = vpop.permute.xlu0 %913
    %v915 = vlaneseq
    %v916 = vshrl.u32 %v915, 7
    %v917 = vsub.s32 %v167, %v916
    %v918 = vrot.slane %v914, %v917
    %v920 = vunpack.c.l.s4 1966171168
    %v921 = vunpack.c.0.s8 %v920
    %v922 = vlaneseq
    %v923 = vshrl.u32 %v922, 7
    %v924 = vsub.s32 %v921, %v923
    %v925 = vrot.slane %v918, %v924
    %v927 = vunpack.c.l.s4 1966171168
    %v928 = vunpack.c.0.s8 %v927
    %v929 = vlaneseq
    %v930 = vshrl.u32 %v929, 7
    %v931 = vsub.s32 %v928, %v930
    %v932 = vrot.slane %v925, %v931
    %v934 = vmax.f32 %v685, %v932
    %v935 = vsub.f32 %v685, %v934
    %v936 = vmul.f32 %v935, 1.442695
    %v937 = vpow.pop %v936
    %v938 = vmul.f32 %v823, %v937
    %v940 = vlaneseq
    %v941 = vshrl.u32 %v940, 7
    %v942 = vsub.s32 0, %v941
    %v943 = vrot.slane %v934, %v942
    %945 = vbcast.lane.b32.xlu0 %v943, 256
    %v946 = vpop.permute.xlu0 %945
    %v948 = vsub.f32 %v829, %v946
    %v949 = vmul.f32 %v948, 1.442695
    %v950 = vpow.pop %v949
    %v952 = vcombine.high %v950, %v950
    %v954 = vunpack.c.l.s4 1966171168
    %v955 = vunpack.c.0.s8 %v954
    %v956 = vlaneseq
    %v957 = vshrl.u32 %v956, 7
    %v958 = vsub.s32 %v955, %v957
    %v959 = vrot.slane %v950, %v958
    %v961 = vunpack.c.l.s4 1966171168
    %v962 = vunpack.c.0.s8 %v961
    %v963 = vlaneseq
    %v964 = vshrl.u32 %v963, 7
    %v965 = vsub.s32 %v962, %v964
    %v966 = vrot.slane %v952, %v965
    %v967 = vcombine.high %v959, %v959
    %v968 = vcombine.high %v966, %v966
    %v970 = vunpack.c.l.s4 1966171168
    %v971 = vunpack.c.0.s8 %v970
    %v972 = vlaneseq
    %v973 = vshrl.u32 %v972, 7
    %v974 = vsub.s32 %v971, %v973
    %v975 = vrot.slane %v959, %v974
    %v977 = vunpack.c.l.s4 1966171168
    %v978 = vunpack.c.0.s8 %v977
    %v979 = vlaneseq
    %v980 = vshrl.u32 %v979, 7
    %v981 = vsub.s32 %v978, %v980
    %v982 = vrot.slane %v966, %v981
    %v984 = vunpack.c.l.s4 1966171168
    %v985 = vunpack.c.0.s8 %v984
    %v986 = vlaneseq
    %v987 = vshrl.u32 %v986, 7
    %v988 = vsub.s32 %v985, %v987
    %v989 = vrot.slane %v967, %v988
    %v991 = vunpack.c.l.s4 1966171168
    %v992 = vunpack.c.0.s8 %v991
    %v993 = vlaneseq
    %v994 = vshrl.u32 %v993, 7
    %v995 = vsub.s32 %v992, %v994
    %v996 = vrot.slane %v968, %v995
    %v997 = vcombine.high %v975, %v975
    %v998 = vcombine.high %v982, %v982
    %v999 = vcombine.high %v989, %v989
    %v1000 = vcombine.high %v996, %v996
    %v1001 = vcombine.low %v975, %v989
    %v1002 = vcombine.low %v997, %v999
    %v1003 = vcombine.low %v982, %v996
    %v1004 = vcombine.low %v998, %v1000
    %v1006 = vunpack.c.l.s4 1966171168
    %v1007 = vunpack.c.0.s8 %v1006
    %v1008 = vlaneseq
    %v1009 = vshrl.u32 %v1008, 7
    %v1010 = vsub.s32 %v1007, %v1009
    %v1011 = vrot.slane %v1001, %v1010
    %v1013 = vunpack.c.l.s4 1966171168
    %v1014 = vunpack.c.0.s8 %v1013
    %v1015 = vlaneseq
    %v1016 = vshrl.u32 %v1015, 7
    %v1017 = vsub.s32 %v1014, %v1016
    %v1018 = vrot.slane %v1002, %v1017
    %v1020 = vunpack.c.l.s4 1966171168
    %v1021 = vunpack.c.0.s8 %v1020
    %v1022 = vlaneseq
    %v1023 = vshrl.u32 %v1022, 7
    %v1024 = vsub.s32 %v1021, %v1023
    %v1025 = vrot.slane %v1003, %v1024
    %v1027 = vunpack.c.l.s4 1966171168
    %v1028 = vunpack.c.0.s8 %v1027
    %v1029 = vlaneseq
    %v1030 = vshrl.u32 %v1029, 7
    %v1031 = vsub.s32 %v1028, %v1030
    %v1032 = vrot.slane %v1004, %v1031
    %v1033 = vcombine.low %v1011, %v1018
    %v1034 = vcombine.low %v1025, %v1032
    %v1036 = vunpack.c.l.s4 1966171168
    %v1037 = vunpack.c.0.s8 %v1036
    %v1038 = vlaneseq
    %v1039 = vshrl.u32 %v1038, 7
    %v1040 = vsub.s32 %v1037, %v1039
    %v1041 = vrot.slane %v1033, %v1040
    %v1043 = vunpack.c.l.s4 1966171168
    %v1044 = vunpack.c.0.s8 %v1043
    %v1045 = vlaneseq
    %v1046 = vshrl.u32 %v1045, 7
    %v1047 = vsub.s32 %v1044, %v1046
    %v1048 = vrot.slane %v1034, %v1047
    %v1049 = vcombine.low %v1041, %v1048
    %1050 = vset.pattern.permute.xlu0 0
    %1051 = vperm.xlu0 %1050, %v1049
    %v1052 = vpop.permute.xlu0 %1051
    %v1053 = vlaneseq
    %v1054 = vshrl.u32 %v1053, 7
    %v1055 = vsub.s32 %v167, %v1054
    %v1056 = vrot.slane %v1052, %v1055
    %v1058 = vunpack.c.l.s4 1966171168
    %v1059 = vunpack.c.0.s8 %v1058
    %v1060 = vlaneseq
    %v1061 = vshrl.u32 %v1060, 7
    %v1062 = vsub.s32 %v1059, %v1061
    %v1063 = vrot.slane %v1056, %v1062
    %v1065 = vunpack.c.l.s4 1966171168
    %v1066 = vunpack.c.0.s8 %v1065
    %v1067 = vlaneseq
    %v1068 = vshrl.u32 %v1067, 7
    %v1069 = vsub.s32 %v1066, %v1068
    %v1070 = vrot.slane %v1063, %v1069
    %v1072 = vadd.f32 %v938, %v1070
    %vm1073 = vcmask 57344
    %1074 = vst.msk [vmem:[#allocation2] sm:$0x1] %vm1073, %v934
    %1075 = vst.msk [vmem:[#allocation3] sm:$0x1] %vm1073, %v1072
    // Predicated region
    $region30: #{tpu_custom_call.1} parent=1 // pred_check
      %p1076 = pneg %p53
    $region31: #{tpu_custom_call.1} parent=1 // pred_check_branch
      %1078 = sbr.rel (%p1076) target = $region33
    $region32: #{tpu_custom_call.1} parent=1 // pred_region
      %v1079 = vld [vmem:[#allocation4] sm:$0x1]
      %v1080 = vld [vmem:[#allocation2] sm:$0x1]
      %v1081 = vsub.f32 %v1079, %v1080
      %v1082 = vld [vmem:[#allocation3] sm:$0x1]
      %v1083 = vlog2.pop %v1082
      %v1084 = vmul.f32 %v1083, 0.6931472
      %v1085 = vsub.f32 %v1081, %v1084
      %v1086 = vmul.f32 %v1085, -1.0
      %1087 = vst.msk [vmem:[#allocation11] sm:$0x1] %vm1073, %v1086
    $region33: #{tpu_custom_call.1} parent=1 // pred_fallthru
      _
    // Predicated region
    $region34: #{tpu_custom_call.1} parent=1 // pred_check
      _
    $region35: #{tpu_custom_call.1} parent=1 // pred_check_branch
      %1089 = sbr.rel (0) target = $region37
    $region36: #{tpu_custom_call.1} parent=1 // pred_region
      %s1091 = ssub.s32 16, 16
      %1092 = vsyncadd [#allocation7], %s1091
      %s1094 = sshll.u32 [#allocation11], 4
      %s1095 = int_to_ptr.vmem [resolvable:$true] %s1094
      %1097 = dma.vmem_to_hbm [thread:$0]  %s1095, 16, %s3, [#allocation7]
    $region37: #{tpu_custom_call.1} parent=1 // pred_fallthru
      _
    // Predicated region
    $region38: #{tpu_custom_call.1} parent=1 // pred_check
      _
    $region39: #{tpu_custom_call.1} parent=1 // pred_check_branch
      %1099 = sbr.rel (0) target = $region41
    $region40: #{tpu_custom_call.1} parent=1 // pred_region
      %1100 = dma.done [#allocation7], 16
    $region41: #{tpu_custom_call.1} parent=1 // pred_fallthru
      _
    %1101 = vsyncpa [#allocation6], 1
    %1102 = vsyncpa [#allocation9], 1
    %1103 = vsyncpa [#allocation7], 1

</llo_original>
